<compile_context>
chip_gen: v7x
topology: tpu7x:2x2x1
jax: 0.10.0
libtpu: 0.0.40
codegen_flags: <defaults>
</compile_context>

<pallas_src>
import functools
import math

import jax
import jax.numpy as jnp
import numpy as np
from jax.experimental import pallas as pl
from jax.experimental.pallas import tpu as pltpu


# ----------------------------------------------------------------------------
# Pallas kernel: one batch element per grid step.
#   x     : (C, L)   signal
#   cond  : (C, 1)   diffusion_projection output (per-channel bias)
#   wd    : (2C, 3C) dilated conv weight, taps concatenated along K
#   bd    : (2C, 1)  dilated conv bias
#   wo    : (2C, C)  1x1 output_projection weight
#   bo    : (2C, 1)  1x1 output_projection bias
# ----------------------------------------------------------------------------
def _residual_block_kernel(x_ref, cond_ref, wd_ref, bd_ref, wo_ref, bo_ref,
                           res_ref, skip_ref, *, dilation):
    f32 = jnp.float32
    x = x_ref[0]                                   # (C, L)
    C, L = x.shape
    d = dilation

    y = x + cond_ref[0]                            # (C, L) + (C, 1)

    # Dilated 3-tap conv taps via XLU lane rolls + VPU masks (no O(L^2) work).
    lane = jax.lax.broadcasted_iota(jnp.int32, (C, L), 1)
    #   y_m[:, i] = y[:, i - d]   (zero-padded left)
    y_m = jnp.where(lane >= d, pltpu.roll(y, d, axis=1), 0.0)
    #   y_p[:, i] = y[:, i + d]   (zero-padded right); roll by L-d == roll by -d
    y_p = jnp.where(lane < L - d, pltpu.roll(y, L - d, axis=1), 0.0)

    # Single fused conv matmul: (2C, 3C) @ (3C, L).
    y_cat = jnp.concatenate([y_m, y, y_p], axis=0)               # (3C, L)
    z = jnp.dot(wd_ref[...], y_cat, preferred_element_type=f32) + bd_ref[...]

    gate = z[:C, :]
    filt = z[C:, :]
    a = jax.nn.sigmoid(gate) * jnp.tanh(filt)                    # (C, L)

    o = jnp.dot(wo_ref[...], a, preferred_element_type=f32) + bo_ref[...]  # (2C, L)

    res_ref[0] = (x + o[:C, :]) * np.float32(1.0 / math.sqrt(2.0))
    skip_ref[0] = o[C:, :]


# ----------------------------------------------------------------------------
# wrapper
# ----------------------------------------------------------------------------
@functools.partial(jax.jit, static_argnames=("dilation",))
def residual_block_forward(x, diffusion_step, params, *, dilation):
    """x: (B, C, L) f32, diffusion_step: (B, 512) f32 -> (residual, skip)."""
    B, C, L = x.shape

    # diffusion_projection: tiny (B,512)x(512,C) GEMM done in plain XLA
    # (per perf review), delivered as a (B, C, 1) column per batch element.
    cond = (diffusion_step @ params["wp"].T + params["bp"])[:, :, None]

    # Pre-reshape PyTorch-layout weights for the kernel.
    W = params["wd"]                                             # (2C, C, 3)
    wd_cat = jnp.concatenate([W[:, :, 0], W[:, :, 1], W[:, :, 2]], axis=1)
    bd = params["bd"][:, None]                                   # (2C, 1)
    wo = params["wo"][:, :, 0]                                   # (2C, C)
    bo = params["bo"][:, None]                                   # (2C, 1)

    kernel = functools.partial(_residual_block_kernel, dilation=dilation)
    res, skip = pl.pallas_call(
        kernel,
        out_shape=(jax.ShapeDtypeStruct((B, C, L), jnp.float32),
                   jax.ShapeDtypeStruct((B, C, L), jnp.float32)),
        grid=(B,),
        in_specs=[
            pl.BlockSpec((1, C, L), lambda b: (b, 0, 0)),        # x
            pl.BlockSpec((1, C, 1), lambda b: (b, 0, 0)),        # cond
            pl.BlockSpec((2 * C, 3 * C), lambda b: (0, 0)),      # wd_cat
            pl.BlockSpec((2 * C, 1), lambda b: (0, 0)),          # bd
            pl.BlockSpec((2 * C, C), lambda b: (0, 0)),          # wo
            pl.BlockSpec((2 * C, 1), lambda b: (0, 0)),          # bo
        ],
        out_specs=(pl.BlockSpec((1, C, L), lambda b: (b, 0, 0)),
                   pl.BlockSpec((1, C, L), lambda b: (b, 0, 0))),
        compiler_params=pltpu.CompilerParams(
            dimension_semantics=("parallel",)),
    )(x, cond, wd_cat, bd, wo, bo)
    return res, skip


# ----------------------------------------------------------------------------
# deterministic parameters in PyTorch layouts
# ----------------------------------------------------------------------------
def make_params(key, C):
    keys = jax.random.split(key, 6)

    def nrm(k, shape, scale):
        return jax.random.normal(k, shape, jnp.float32) * jnp.float32(scale)

    return {
        # diffusion_projection = nn.Linear(512, C)
        "wp": nrm(keys[0], (C, 512), 1.0 / math.sqrt(512)),
        "bp": nrm(keys[1], (C,), 0.02),
        # dilated_conv = nn.Conv1d(C, 2C, 3, padding=d, dilation=d)
        "wd": nrm(keys[2], (2 * C, C, 3), 1.0 / math.sqrt(3 * C)),
        "bd": nrm(keys[3], (2 * C,), 0.02),
        # output_projection = nn.Conv1d(C, 2C, 1)
        "wo": nrm(keys[4], (2 * C, C, 1), 1.0 / math.sqrt(C)),
        "bo": nrm(keys[5], (2 * C,), 0.02),
    }


# ----------------------------------------------------------------------------
# pure-JAX reference (mirrors the PyTorch forward exactly)
# ----------------------------------------------------------------------------
def reference_forward(x, diffusion_step, params, dilation):
    B, C, L = x.shape
    d = dilation
    cond = diffusion_step @ params["wp"].T + params["bp"]        # (B, C)
    y = x + cond[:, :, None]
    ypad = jnp.pad(y, ((0, 0), (0, 0), (d, d)))
    W = params["wd"]
    z = (jnp.einsum("oc,bcl->bol", W[:, :, 0], ypad[:, :, 0:L])
         + jnp.einsum("oc,bcl->bol", W[:, :, 1], ypad[:, :, d:d + L])
         + jnp.einsum("oc,bcl->bol", W[:, :, 2], ypad[:, :, 2 * d:2 * d + L])
         + params["bd"][None, :, None])
    gate, filt = z[:, :C], z[:, C:]
    a = jax.nn.sigmoid(gate) * jnp.tanh(filt)
    o = (jnp.einsum("oc,bcl->bol", params["wo"][:, :, 0], a)
         + params["bo"][None, :, None])
    residual, skip = o[:, :C], o[:, C:]
    return (x + residual) / math.sqrt(2.0), skip


# ----------------------------------------------------------------------------
if __name__ == "__main__":
    B, C, L = 2, 64, 256            # residual_channels=64 (module default)
    dilation = 4

    key = jax.random.PRNGKey(0)
    kp, kx, kd = jax.random.split(key, 3)
    params = make_params(kp, C)
    x = jax.random.normal(kx, (B, C, L), jnp.float32)
    diffusion_step = jax.random.normal(kd, (B, 512), jnp.float32)

    res, skip = residual_block_forward(x, diffusion_step, params,
                                       dilation=dilation)
    res, skip = jax.block_until_ready((res, skip))

    ref_res, ref_skip = reference_forward(x, diffusion_step, params, dilation)
    ref_res, ref_skip = jax.block_until_ready((ref_res, ref_skip))

    assert res.shape == (B, C, L) and skip.shape == (B, C, L)
    np.testing.assert_allclose(np.asarray(res), np.asarray(ref_res),
                               rtol=1e-3, atol=1e-3)
    np.testing.assert_allclose(np.asarray(skip), np.asarray(ref_skip),
                               rtol=1e-3, atol=1e-3)
    print("KERNEL_OK")
</pallas_src>

<mosaic_0001>
module attributes {stable_mosaic.version = 11 : i64} {
  func.func @_residual_block_kernel(%arg0: i32, %arg1: memref<1x64x256xf32, #tpu.memory_space<vmem>>, %arg2: memref<1x64x1xf32, #tpu.memory_space<vmem>>, %arg3: memref<128x192xf32, #tpu.memory_space<vmem>>, %arg4: memref<128x1xf32, #tpu.memory_space<vmem>>, %arg5: memref<128x64xf32, #tpu.memory_space<vmem>>, %arg6: memref<128x1xf32, #tpu.memory_space<vmem>>, %arg7: memref<1x64x256xf32, #tpu.memory_space<vmem>>, %arg8: memref<1x64x256xf32, #tpu.memory_space<vmem>>) attributes {dimension_semantics = [#tpu.dimension_semantics<parallel>], iteration_bounds = array<i64: 2>, scalar_prefetch = 0 : i64, scratch_operands = 0 : i64, tpu.core_type = #tpu.core_type<tc>, window_params = [{transform_indices = @transform_0, window_bounds = array<i64: 1, 64, 256>}, {transform_indices = @transform_1, window_bounds = array<i64: 1, 64, 1>}, {pipeline_mode = #tpu.pipeline_mode<synchronous>, transform_indices = @transform_2, window_bounds = array<i64: 128, 192>}, {pipeline_mode = #tpu.pipeline_mode<synchronous>, transform_indices = @transform_3, window_bounds = array<i64: 128, 1>}, {pipeline_mode = #tpu.pipeline_mode<synchronous>, transform_indices = @transform_4, window_bounds = array<i64: 128, 64>}, {pipeline_mode = #tpu.pipeline_mode<synchronous>, transform_indices = @transform_5, window_bounds = array<i64: 128, 1>}, {transform_indices = @transform_6, window_bounds = array<i64: 1, 64, 256>}, {transform_indices = @transform_7, window_bounds = array<i64: 1, 64, 256>}]} {
    %c0 = arith.constant 0 : index
    %c0_0 = arith.constant 0 : index
    %c0_1 = arith.constant 0 : index
    %0 = vector.load %arg1[%c0, %c0_0, %c0_1] : memref<1x64x256xf32, #tpu.memory_space<vmem>>, vector<1x64x256xf32>
    %1 = vector.shape_cast %0 : vector<1x64x256xf32> to vector<64x256xf32>
    %c0_2 = arith.constant 0 : index
    %c0_3 = arith.constant 0 : index
    %c0_4 = arith.constant 0 : index
    %2 = vector.load %arg2[%c0_2, %c0_3, %c0_4] : memref<1x64x1xf32, #tpu.memory_space<vmem>>, vector<1x64x1xf32>
    %3 = vector.shape_cast %2 : vector<1x64x1xf32> to vector<64x1xf32>
    %4 = vector.broadcast %3 : vector<64x1xf32> to vector<64x256xf32>
    %5 = arith.addf %1, %4 : vector<64x256xf32>
    %6 = tpu.iota {dimensions = array<i32: 1>} : vector<64x256xi32>
    %c4_i32 = arith.constant 4 : i32
    %7 = vector.broadcast %c4_i32 : i32 to vector<64x256xi32>
    %8 = arith.cmpi sge, %6, %7 : vector<64x256xi32>
    %c4_i32_5 = arith.constant 4 : i32
    %9 = tpu.dynamic_rotate %5 by %c4_i32_5 dim 1 : vector<64x256xf32>, i32 -> vector<64x256xf32>
    %cst = arith.constant 0.000000e+00 : f32
    %10 = vector.broadcast %cst : f32 to vector<64x256xf32>
    %11 = arith.select %8, %9, %10 : vector<64x256xi1>, vector<64x256xf32>
    %c252_i32 = arith.constant 252 : i32
    %12 = vector.broadcast %c252_i32 : i32 to vector<64x256xi32>
    %13 = arith.cmpi slt, %6, %12 : vector<64x256xi32>
    %c252_i32_6 = arith.constant 252 : i32
    %14 = tpu.dynamic_rotate %5 by %c252_i32_6 dim 1 : vector<64x256xf32>, i32 -> vector<64x256xf32>
    %cst_7 = arith.constant 0.000000e+00 : f32
    %15 = vector.broadcast %cst_7 : f32 to vector<64x256xf32>
    %16 = arith.select %13, %14, %15 : vector<64x256xi1>, vector<64x256xf32>
    %17 = tpu.concatenate %11, %5, %16 in 0 : vector<64x256xf32>, vector<64x256xf32>, vector<64x256xf32> -> vector<192x256xf32>
    %c0_8 = arith.constant 0 : index
    %c0_9 = arith.constant 0 : index
    %18 = vector.load %arg3[%c0_8, %c0_9] : memref<128x192xf32, #tpu.memory_space<vmem>>, vector<128x192xf32>
    %cst_10 = arith.constant dense<0.000000e+00> : vector<128x256xf32>
    %19 = tpu.matmul %18, %17, %cst_10 {dimension_numbers = #tpu.dot_dimension_numbers<[1], [0], [0], [1], [0, 0, 1, 1], [], []>} : vector<128x192xf32>, vector<192x256xf32>, vector<128x256xf32> -> vector<128x256xf32>
    %c0_11 = arith.constant 0 : index
    %c0_12 = arith.constant 0 : index
    %20 = vector.load %arg4[%c0_11, %c0_12] : memref<128x1xf32, #tpu.memory_space<vmem>>, vector<128x1xf32>
    %21 = vector.broadcast %20 : vector<128x1xf32> to vector<128x256xf32>
    %22 = arith.addf %19, %21 : vector<128x256xf32>
    %23 = vector.extract_strided_slice %22 {offsets = [0, 0], sizes = [64, 256], strides = [1, 1]} : vector<128x256xf32> to vector<64x256xf32>
    %24 = vector.extract_strided_slice %22 {offsets = [64, 0], sizes = [64, 256], strides = [1, 1]} : vector<128x256xf32> to vector<64x256xf32>
    %25 = arith.negf %23 : vector<64x256xf32>
    %26 = math.exp %25 : vector<64x256xf32>
    %cst_13 = arith.constant 1.000000e+00 : f32
    %27 = vector.broadcast %cst_13 : f32 to vector<64x256xf32>
    %28 = arith.addf %27, %26 : vector<64x256xf32>
    %29 = arith.divf %27, %28 : vector<64x256xf32>
    %30 = math.tanh %24 : vector<64x256xf32>
    %31 = arith.mulf %29, %30 : vector<64x256xf32>
    %c0_14 = arith.constant 0 : index
    %c0_15 = arith.constant 0 : index
    %32 = vector.load %arg5[%c0_14, %c0_15] : memref<128x64xf32, #tpu.memory_space<vmem>>, vector<128x64xf32>
    %cst_16 = arith.constant dense<0.000000e+00> : vector<128x256xf32>
    %33 = tpu.matmul %32, %31, %cst_16 {dimension_numbers = #tpu.dot_dimension_numbers<[1], [0], [0], [1], [0, 0, 1, 1], [], []>} : vector<128x64xf32>, vector<64x256xf32>, vector<128x256xf32> -> vector<128x256xf32>
    %c0_17 = arith.constant 0 : index
    %c0_18 = arith.constant 0 : index
    %34 = vector.load %arg6[%c0_17, %c0_18] : memref<128x1xf32, #tpu.memory_space<vmem>>, vector<128x1xf32>
    %35 = vector.broadcast %34 : vector<128x1xf32> to vector<128x256xf32>
    %36 = arith.addf %33, %35 : vector<128x256xf32>
    %37 = vector.extract_strided_slice %36 {offsets = [0, 0], sizes = [64, 256], strides = [1, 1]} : vector<128x256xf32> to vector<64x256xf32>
    %38 = arith.addf %1, %37 : vector<64x256xf32>
    %cst_19 = arith.constant 0.707106769 : f32
    %39 = vector.broadcast %cst_19 : f32 to vector<64x256xf32>
    %40 = arith.mulf %38, %39 : vector<64x256xf32>
    %c0_20 = arith.constant 0 : index
    %c0_21 = arith.constant 0 : index
    %c0_22 = arith.constant 0 : index
    %41 = vector.load %arg7[%c0_20, %c0_21, %c0_22] : memref<1x64x256xf32, #tpu.memory_space<vmem>>, vector<1x64x256xf32>
    %42 = vector.shape_cast %41 : vector<1x64x256xf32> to vector<64x256xf32>
    %43 = vector.shape_cast %40 : vector<64x256xf32> to vector<1x64x256xf32>
    tpu.vector_store %arg7[%c0_20, %c0_21, %c0_22], %43 {strides = array<i32>} : memref<1x64x256xf32, #tpu.memory_space<vmem>>, vector<1x64x256xf32>,
    %44 = vector.extract_strided_slice %36 {offsets = [64, 0], sizes = [64, 256], strides = [1, 1]} : vector<128x256xf32> to vector<64x256xf32>
    %c0_23 = arith.constant 0 : index
    %c0_24 = arith.constant 0 : index
    %c0_25 = arith.constant 0 : index
    %45 = vector.load %arg8[%c0_23, %c0_24, %c0_25] : memref<1x64x256xf32, #tpu.memory_space<vmem>>, vector<1x64x256xf32>
    %46 = vector.shape_cast %45 : vector<1x64x256xf32> to vector<64x256xf32>
    %47 = vector.shape_cast %44 : vector<64x256xf32> to vector<1x64x256xf32>
    tpu.vector_store %arg8[%c0_23, %c0_24, %c0_25], %47 {strides = array<i32>} : memref<1x64x256xf32, #tpu.memory_space<vmem>>, vector<1x64x256xf32>,
    return
  }
  func.func @transform_0(%arg0: i32) -> (i32, i32, i32) {
    %c0_i32 = arith.constant 0 : i32
    %c0_i32_0 = arith.constant 0 : i32
    %c0_i32_1 = arith.constant 0 : i32
    return %arg0, %c0_i32, %c0_i32_0 : i32, i32, i32
  }
  func.func @transform_1(%arg0: i32) -> (i32, i32, i32) {
    %c0_i32 = arith.constant 0 : i32
    %c0_i32_0 = arith.constant 0 : i32
    %c0_i32_1 = arith.constant 0 : i32
    return %arg0, %c0_i32, %c0_i32_0 : i32, i32, i32
  }
  func.func @transform_2(%arg0: i32) -> (i32, i32) {
    %c0_i32 = arith.constant 0 : i32
    %c0_i32_0 = arith.constant 0 : i32
    %c0_i32_1 = arith.constant 0 : i32
    return %c0_i32, %c0_i32_0 : i32, i32
  }
  func.func @transform_3(%arg0: i32) -> (i32, i32) {
    %c0_i32 = arith.constant 0 : i32
    %c0_i32_0 = arith.constant 0 : i32
    %c0_i32_1 = arith.constant 0 : i32
    return %c0_i32, %c0_i32_0 : i32, i32
  }
  func.func @transform_4(%arg0: i32) -> (i32, i32) {
    %c0_i32 = arith.constant 0 : i32
    %c0_i32_0 = arith.constant 0 : i32
    %c0_i32_1 = arith.constant 0 : i32
    return %c0_i32, %c0_i32_0 : i32, i32
  }
  func.func @transform_5(%arg0: i32) -> (i32, i32) {
    %c0_i32 = arith.constant 0 : i32
    %c0_i32_0 = arith.constant 0 : i32
    %c0_i32_1 = arith.constant 0 : i32
    return %c0_i32, %c0_i32_0 : i32, i32
  }
  func.func @transform_6(%arg0: i32) -> (i32, i32, i32) {
    %c0_i32 = arith.constant 0 : i32
    %c0_i32_0 = arith.constant 0 : i32
    %c0_i32_1 = arith.constant 0 : i32
    return %arg0, %c0_i32, %c0_i32_0 : i32, i32, i32
  }
  func.func @transform_7(%arg0: i32) -> (i32, i32, i32) {
    %c0_i32 = arith.constant 0 : i32
    %c0_i32_0 = arith.constant 0 : i32
    %c0_i32_1 = arith.constant 0 : i32
    return %arg0, %c0_i32, %c0_i32_0 : i32, i32, i32
  }
}

</mosaic_0001>

<llo_original>
// kernel: residual_block_forward.1
$region0: #{residual_block_forward.1}
  #allocation0 [shape = 'u32[]', space=smem, size = 0x4, offset = 0x4, fixed_abs, tag = 'smem constant byte address 0x4 - core index']
  #allocation1 [shape = 'u32[144,128]{1,0:T(1,128)}', space=vmem, size = 0x12000, scoped, tag = 'internal scratch']
  %s0 = inlined_call_operand.vmem [shape: f32[2,64,256], index: 0, kind: input, shape index: {}]
  %s1 = inlined_call_operand.vmem [shape: f32[2,64,1], index: 1, kind: input, shape index: {}]
  %s2 = inlined_call_operand.vmem [shape: f32[128,192], index: 2, kind: input, shape index: {}]
  %s3 = inlined_call_operand.vmem [shape: f32[128,1], index: 3, kind: input, shape index: {}]
  %s4 = inlined_call_operand.vmem [shape: f32[128,64], index: 4, kind: input, shape index: {}]
  %s5 = inlined_call_operand.vmem [shape: f32[128,1], index: 5, kind: input, shape index: {}]
  %s6 = inlined_call_operand.hbm [shape: f32[2,64,256], index: 6, kind: output, shape index: {0}]
  %s7 = inlined_call_operand.hbm [shape: f32[2,64,256], index: 7, kind: output, shape index: {1}]
  %8 = xla_tuple %s6, %s7
  %s9 = sld [smem:[#allocation0]]
  $region65: #{residual_block_forward.1} parent=0
    _
  %s11 = ssub.s32 1, %s9
  %s12 = scalar_select 0, %s11, %s9
  $region1: #{residual_block_forward.1} parent=0
    #allocation2 [shape = 'u8[131072]{0}', space=vmem, size = 0x20000, scoped, tag = 'output window, operand 0']
    #allocation3 [shape = 's32[2]{0}', space=sflag, size = 0x8, scoped, tag = 'scoped memory for residual_block_forward.1']
    #allocation4 [shape = 'u8[131072]{0}', space=vmem, size = 0x20000, scoped, tag = 'output window, operand 1']
    #allocation5 [shape = 's32[2]{0}', space=sflag, size = 0x8, scoped, tag = 'scoped memory for residual_block_forward.1']
    %13 = vsyncpa [#allocation3], 0
    %s14 = scalar_lea.sflag [#allocation3], 1
    %15 = vsyncpa %s14, 0
    %16 = vsyncpa [#allocation5], 0
    %s17 = scalar_lea.sflag [#allocation5], 1
    %18 = vsyncpa %s17, 0
    loop: start=0, step=1, limit=4
    $region2: #{residual_block_forward.1} parent=1 // loop_pre_header
      _
    $region3: #{residual_block_forward.1} parent=1 // loop_header
      %s20 = sphi 0, %s24
      %p21 = scmp.ge.s32.totalorder %s20, 4
      %s30 = sphi 0, %s32
      %s33 = sphi 0, %s30
      %s34 = sphi 0, %s33
      %s50 = sphi 0, %s34
      %s56 = sphi 0, %s58
      %s59 = sphi 0, %s56
      %s60 = sphi 0, %s59
      %s76 = sphi 0, %s60
      %s80 = sphi 0, %s80
      %s82 = sphi 0, %s80
      %s83 = sphi 0, %s82
      %s97 = sphi 0, %s83
      %s101 = sphi 0, %s101
      %s103 = sphi 0, %s101
      %s104 = sphi 0, %s103
      %s118 = sphi 0, %s104
      %s122 = sphi 0, %s122
      %s124 = sphi 0, %s122
      %s125 = sphi 0, %s124
      %s139 = sphi 0, %s125
      %s143 = sphi 0, %s143
      %s145 = sphi 0, %s143
      %s146 = sphi 0, %s145
      %s160 = sphi 0, %s146
      %s166 = sphi 0, %s168
      %s169 = sphi 0, %s166
      %s170 = sphi 0, %s169
      %s186 = sphi 0, %s170
      %s192 = sphi 0, %s194
      %s195 = sphi 0, %s192
      %s196 = sphi 0, %s195
      %s212 = sphi 0, %s196
    $region4: #{residual_block_forward.1} parent=1 // loop_header_branch
      %23 = sbr.rel (%p21) target = $region8
    $region5: #{residual_block_forward.1} parent=1 // loop_body
      %s25 = ssub.s32 %s20, 1
      %s26 = ssub.s32 %s20, 2
      %s27 = sadd.s32 %s20, 1
      %s28 = ssub.s32 %s20, %s27
      %p29 = scmp.eq.s32.totalorder %s28, 0
      %s31 = sadd.s32 %s30, 1
      %s32 = scalar_select %p29, %s30, %s31
      %p35 = pneg %p29
      %p36 = scmp.eq.s32.totalorder %s20, 1
      %p37 = por %p35, %p36
      %p38 = scmp.ne.s32.totalorder %s30, %s33
      %p39 = scmp.eq.s32.totalorder %s20, 0
      %p40 = por %p38, %p39
      %p41 = scmp.ne.s32.totalorder %s30, %s33
      %p42 = scmp.eq.s32.totalorder %s25, 1
      %p43 = por %p41, %p42
      %p44 = scmp.ne.s32.totalorder %s33, %s34
      %p45 = scmp.eq.s32.totalorder %s25, 0
      %p46 = por %p44, %p45
      %p47 = scmp.ne.s32.totalorder %s33, %s34
      %p48 = scmp.eq.s32.totalorder %s26, 1
      %p49 = por %p47, %p48
      %p51 = scmp.ne.s32.totalorder %s34, %s50
      %p52 = scmp.eq.s32.totalorder %s26, 0
      %p53 = por %p51, %p52
      %s54 = ssub.s32 %s20, %s27
      %p55 = scmp.eq.s32.totalorder %s54, 0
      %s57 = sadd.s32 %s56, 1
      %s58 = scalar_select %p55, %s56, %s57
      %p61 = pneg %p55
      %p62 = scmp.eq.s32.totalorder %s20, 1
      %p63 = por %p61, %p62
      %p64 = scmp.ne.s32.totalorder %s56, %s59
      %p65 = scmp.eq.s32.totalorder %s20, 0
      %p66 = por %p64, %p65
      %p67 = scmp.ne.s32.totalorder %s56, %s59
      %p68 = scmp.eq.s32.totalorder %s25, 1
      %p69 = por %p67, %p68
      %p70 = scmp.ne.s32.totalorder %s59, %s60
      %p71 = scmp.eq.s32.totalorder %s25, 0
      %p72 = por %p70, %p71
      %p73 = scmp.ne.s32.totalorder %s59, %s60
      %p74 = scmp.eq.s32.totalorder %s26, 1
      %p75 = por %p73, %p74
      %p77 = scmp.ne.s32.totalorder %s60, %s76
      %p78 = scmp.eq.s32.totalorder %s26, 0
      %p79 = por %p77, %p78
      %s81 = sadd.s32 %s80, 1
      %p84 = scmp.eq.s32.totalorder %s20, 1
      %p85 = scmp.ne.s32.totalorder %s80, %s82
      %p86 = scmp.eq.s32.totalorder %s20, 0
      %p87 = por %p85, %p86
      %p88 = scmp.ne.s32.totalorder %s80, %s82
      %p89 = scmp.eq.s32.totalorder %s25, 1
      %p90 = por %p88, %p89
      %p91 = scmp.ne.s32.totalorder %s82, %s83
      %p92 = scmp.eq.s32.totalorder %s25, 0
      %p93 = por %p91, %p92
      %p94 = scmp.ne.s32.totalorder %s82, %s83
      %p95 = scmp.eq.s32.totalorder %s26, 1
      %p96 = por %p94, %p95
      %p98 = scmp.ne.s32.totalorder %s83, %s97
      %p99 = scmp.eq.s32.totalorder %s26, 0
      %p100 = por %p98, %p99
      %s102 = sadd.s32 %s101, 1
      %p105 = scmp.eq.s32.totalorder %s20, 1
      %p106 = scmp.ne.s32.totalorder %s101, %s103
      %p107 = scmp.eq.s32.totalorder %s20, 0
      %p108 = por %p106, %p107
      %p109 = scmp.ne.s32.totalorder %s101, %s103
      %p110 = scmp.eq.s32.totalorder %s25, 1
      %p111 = por %p109, %p110
      %p112 = scmp.ne.s32.totalorder %s103, %s104
      %p113 = scmp.eq.s32.totalorder %s25, 0
      %p114 = por %p112, %p113
      %p115 = scmp.ne.s32.totalorder %s103, %s104
      %p116 = scmp.eq.s32.totalorder %s26, 1
      %p117 = por %p115, %p116
      %p119 = scmp.ne.s32.totalorder %s104, %s118
      %p120 = scmp.eq.s32.totalorder %s26, 0
      %p121 = por %p119, %p120
      %s123 = sadd.s32 %s122, 1
      %p126 = scmp.eq.s32.totalorder %s20, 1
      %p127 = scmp.ne.s32.totalorder %s122, %s124
      %p128 = scmp.eq.s32.totalorder %s20, 0
      %p129 = por %p127, %p128
      %p130 = scmp.ne.s32.totalorder %s122, %s124
      %p131 = scmp.eq.s32.totalorder %s25, 1
      %p132 = por %p130, %p131
      %p133 = scmp.ne.s32.totalorder %s124, %s125
      %p134 = scmp.eq.s32.totalorder %s25, 0
      %p135 = por %p133, %p134
      %p136 = scmp.ne.s32.totalorder %s124, %s125
      %p137 = scmp.eq.s32.totalorder %s26, 1
      %p138 = por %p136, %p137
      %p140 = scmp.ne.s32.totalorder %s125, %s139
      %p141 = scmp.eq.s32.totalorder %s26, 0
      %p142 = por %p140, %p141
      %s144 = sadd.s32 %s143, 1
      %p147 = scmp.eq.s32.totalorder %s20, 1
      %p148 = scmp.ne.s32.totalorder %s143, %s145
      %p149 = scmp.eq.s32.totalorder %s20, 0
      %p150 = por %p148, %p149
      %p151 = scmp.ne.s32.totalorder %s143, %s145
      %p152 = scmp.eq.s32.totalorder %s25, 1
      %p153 = por %p151, %p152
      %p154 = scmp.ne.s32.totalorder %s145, %s146
      %p155 = scmp.eq.s32.totalorder %s25, 0
      %p156 = por %p154, %p155
      %p157 = scmp.ne.s32.totalorder %s145, %s146
      %p158 = scmp.eq.s32.totalorder %s26, 1
      %p159 = por %p157, %p158
      %p161 = scmp.ne.s32.totalorder %s146, %s160
      %p162 = scmp.eq.s32.totalorder %s26, 0
      %p163 = por %p161, %p162
      %s164 = ssub.s32 %s20, %s27
      %p165 = scmp.eq.s32.totalorder %s164, 0
      %s167 = sadd.s32 %s166, 1
      %s168 = scalar_select %p165, %s166, %s167
      %p171 = pneg %p165
      %p172 = scmp.eq.s32.totalorder %s20, 1
      %p173 = por %p171, %p172
      %p174 = scmp.ne.s32.totalorder %s166, %s169
      %p175 = scmp.eq.s32.totalorder %s20, 0
      %p176 = por %p174, %p175
      %p177 = scmp.ne.s32.totalorder %s166, %s169
      %p178 = scmp.eq.s32.totalorder %s25, 1
      %p179 = por %p177, %p178
      %p180 = scmp.ne.s32.totalorder %s169, %s170
      %p181 = scmp.eq.s32.totalorder %s25, 0
      %p182 = por %p180, %p181
      %p183 = scmp.ne.s32.totalorder %s169, %s170
      %p184 = scmp.eq.s32.totalorder %s26, 1
      %p185 = por %p183, %p184
      %p187 = scmp.ne.s32.totalorder %s170, %s186
      %p188 = scmp.eq.s32.totalorder %s26, 0
      %p189 = por %p187, %p188
      %s190 = ssub.s32 %s20, %s27
      %p191 = scmp.eq.s32.totalorder %s190, 0
      %s193 = sadd.s32 %s192, 1
      %s194 = scalar_select %p191, %s192, %s193
      %p197 = pneg %p191
      %p198 = scmp.eq.s32.totalorder %s20, 1
      %p199 = por %p197, %p198
      %p200 = scmp.ne.s32.totalorder %s192, %s195
      %p201 = scmp.eq.s32.totalorder %s20, 0
      %p202 = por %p200, %p201
      %p203 = scmp.ne.s32.totalorder %s192, %s195
      %p204 = scmp.eq.s32.totalorder %s25, 1
      %p205 = por %p203, %p204
      %p206 = scmp.ne.s32.totalorder %s195, %s196
      %p207 = scmp.eq.s32.totalorder %s25, 0
      %p208 = por %p206, %p207
      %p209 = scmp.ne.s32.totalorder %s195, %s196
      %p210 = scmp.eq.s32.totalorder %s26, 1
      %p211 = por %p209, %p210
      %p213 = scmp.ne.s32.totalorder %s196, %s212
      %p214 = scmp.eq.s32.totalorder %s26, 0
      %p215 = por %p213, %p214
      %p216 = scmp.le.s32.totalorder 1, %s20
      %p217 = scmp.lt.s32.totalorder %s20, 3
      %p218 = pnand %p216, %p217
      %p219 = pneg %p218
      // Predicated region
      $region9: #{residual_block_forward.1} parent=5 // pred_check
        _
      $region10: #{residual_block_forward.1} parent=5 // pred_check_branch
        %221 = sbr.rel (%p218) target = $region12
      $region11: #{residual_block_forward.1} parent=5 // pred_region
        %s222 = ssub.s32 %s20, 1
        // Predicated region
        $region13: #{residual_block_forward.1} parent=11 // pred_check
          %p223 = pneg %p93
        $region14: #{residual_block_forward.1} parent=11 // pred_check_branch
          %225 = sbr.rel (%p223) target = $region16
        $region15: #{residual_block_forward.1} parent=11 // pred_region
          _
        $region16: #{residual_block_forward.1} parent=11 // pred_fallthru
          _
        // Predicated region
        $region17: #{residual_block_forward.1} parent=11 // pred_check
          %p226 = pneg %p114
        $region18: #{residual_block_forward.1} parent=11 // pred_check_branch
          %228 = sbr.rel (%p226) target = $region20
        $region19: #{residual_block_forward.1} parent=11 // pred_region
          _
        $region20: #{residual_block_forward.1} parent=11 // pred_fallthru
          _
        // Predicated region
        $region21: #{residual_block_forward.1} parent=11 // pred_check
          %p229 = pneg %p135
        $region22: #{residual_block_forward.1} parent=11 // pred_check_branch
          %231 = sbr.rel (%p229) target = $region24
        $region23: #{residual_block_forward.1} parent=11 // pred_region
          _
        $region24: #{residual_block_forward.1} parent=11 // pred_fallthru
          _
        // Predicated region
        $region25: #{residual_block_forward.1} parent=11 // pred_check
          %p232 = pneg %p156
        $region26: #{residual_block_forward.1} parent=11 // pred_check_branch
          %234 = sbr.rel (%p232) target = $region28
        $region27: #{residual_block_forward.1} parent=11 // pred_region
          _
        $region28: #{residual_block_forward.1} parent=11 // pred_fallthru
          _
      $region12: #{residual_block_forward.1} parent=5 // pred_fallthru
        _
      %p235 = scmp.lt.s32.totalorder %s20, 2
      // Predicated region
      $region29: #{residual_block_forward.1} parent=5 // pred_check
        %p236 = pneg %p235
      $region30: #{residual_block_forward.1} parent=5 // pred_check_branch
        %238 = sbr.rel (%p236) target = $region32
      $region31: #{residual_block_forward.1} parent=5 // pred_region
        // Predicated region
        $region33: #{residual_block_forward.1} parent=31 // pred_check
          %p239 = pneg %p40
        $region34: #{residual_block_forward.1} parent=31 // pred_check_branch
          %241 = sbr.rel (%p239) target = $region36
        $region35: #{residual_block_forward.1} parent=31 // pred_region
          %p242 = scmp.lt.s32.totalorder %s20, 1
          %s243 = scalar_select %p242, %s20, 1
          %s244 = smul.addr %s243, 16
          %s245 = smul.addr %s244, 8
          %s246 = scalar_lea.vmem %s0, %s245
        $region36: #{residual_block_forward.1} parent=31 // pred_fallthru
          _
        // Predicated region
        $region37: #{residual_block_forward.1} parent=31 // pred_check
          %p247 = pneg %p66
        $region38: #{residual_block_forward.1} parent=31 // pred_check_branch
          %249 = sbr.rel (%p247) target = $region40
        $region39: #{residual_block_forward.1} parent=31 // pred_region
          %p250 = scmp.lt.s32.totalorder %s20, 1
          %s251 = scalar_select %p250, %s20, 1
          %s252 = smul.addr %s251, 8
          %s253 = smul.addr %s252, 8
          %s254 = scalar_lea.vmem %s1, %s253
        $region40: #{residual_block_forward.1} parent=31 // pred_fallthru
          _
      $region32: #{residual_block_forward.1} parent=5 // pred_fallthru
        _
      %p255 = scmp.le.s32.totalorder 1, %s20
      %p256 = scmp.lt.s32.totalorder %s20, 3
      %p257 = pnand %p255, %p256
      %p258 = pneg %p257
      // Predicated region
      $region41: #{residual_block_forward.1} parent=5 // pred_check
        _
      $region42: #{residual_block_forward.1} parent=5 // pred_check_branch
        %260 = sbr.rel (%p257) target = $region44
      $region43: #{residual_block_forward.1} parent=5 // pred_region
        %s261 = ssub.s32 %s20, 1
        %p262 = scmp.lt.s32.totalorder %s25, 1
        %s263 = scalar_select %p262, %s25, 1
        %s264 = smul.addr %s263, 16
        %s265 = smul.addr %s264, 8
        %s266 = scalar_lea.vmem %s0, %s265
        %p267 = pneg %p46
        %p268 = pneg %p43
        %p269 = scmp.lt.s32.totalorder %s25, 1
        %s270 = scalar_select %p269, %s25, 1
        %s271 = smul.addr %s270, 8
        %s272 = smul.addr %s271, 8
        %s273 = scalar_lea.vmem %s1, %s272
        %p274 = pneg %p72
        %p275 = pneg %p69
        %p276 = pneg %p93
        %p277 = pneg %p90
        %p278 = pneg %p114
        %p279 = pneg %p111
        %p280 = pneg %p135
        %p281 = pneg %p132
        %p282 = pneg %p156
        %p283 = pneg %p153
        %p284 = pneg %p182
        %p285 = pneg %p179
        %s286 = sand.u32 %s169, 1
        %s287 = scalar_lea.sflag [#allocation3], %s286
        %s288 = sand.u32 %s169, 1
        %s289 = smul.addr %s288, 128
        %s290 = scalar_lea.vmem [#allocation2], %s289
        %p291 = pneg %p208
        %p292 = pneg %p205
        %s293 = sand.u32 %s195, 1
        %s294 = scalar_lea.sflag [#allocation5], %s293
        %s295 = sand.u32 %s195, 1
        %s296 = smul.addr %s295, 128
        %s297 = scalar_lea.vmem [#allocation4], %s296
        %p298 = scmp.lt.s32.totalorder %s25, 1
        %s299 = scalar_select %p298, %s25, 1
        %s300 = smul.addr %s299, 16
        %s301 = smul.addr %s300, 8
        %s302 = scalar_lea.vmem %s0, %s301
        %p303 = scmp.lt.s32.totalorder %s25, 1
        %s304 = scalar_select %p303, %s25, 1
        %s305 = smul.addr %s304, 8
        %s306 = smul.addr %s305, 8
        %s307 = scalar_lea.vmem %s1, %s306
        %v308 = vld [vmem:[%s302] sm:$0xff]
        %v309 = vld [vmem:[%s302 + $0x8] sm:$0xff]
        %v310 = vld [vmem:[%s302 + $0x10] sm:$0xff]
        %v311 = vld [vmem:[%s302 + $0x18] sm:$0xff]
        %v312 = vld [vmem:[%s302 + $0x20] sm:$0xff]
        %v313 = vld [vmem:[%s302 + $0x28] sm:$0xff]
        %v314 = vld [vmem:[%s302 + $0x30] sm:$0xff]
        %v315 = vld [vmem:[%s302 + $0x38] sm:$0xff]
        %v316 = vld [vmem:[%s302 + $0x40] sm:$0xff]
        %v317 = vld [vmem:[%s302 + $0x48] sm:$0xff]
        %v318 = vld [vmem:[%s302 + $0x50] sm:$0xff]
        %v319 = vld [vmem:[%s302 + $0x58] sm:$0xff]
        %v320 = vld [vmem:[%s302 + $0x60] sm:$0xff]
        %v321 = vld [vmem:[%s302 + $0x68] sm:$0xff]
        %v322 = vld [vmem:[%s302 + $0x70] sm:$0xff]
        %v323 = vld [vmem:[%s302 + $0x78] sm:$0xff]
        %v324 = vld [vmem:[%s307] sm:$0xff]
        %v325 = vld [vmem:[%s307 + $0x8] sm:$0xff]
        %v326 = vld [vmem:[%s307 + $0x10] sm:$0xff]
        %v327 = vld [vmem:[%s307 + $0x18] sm:$0xff]
        %v328 = vld [vmem:[%s307 + $0x20] sm:$0xff]
        %v329 = vld [vmem:[%s307 + $0x28] sm:$0xff]
        %v330 = vld [vmem:[%s307 + $0x30] sm:$0xff]
        %v331 = vld [vmem:[%s307 + $0x38] sm:$0xff]
        %333 = vset.pattern.permute.xlu0 0
        %334 = vperm.xlu0 %333, %v324
        %v335 = vpop.permute.xlu0 %334
        %338 = vset.pattern.permute.xlu0 0
        %339 = vperm.xlu0 %338, %v325
        %v340 = vpop.permute.xlu0 %339
        %343 = vset.pattern.permute.xlu0 0
        %344 = vperm.xlu0 %343, %v326
        %v345 = vpop.permute.xlu0 %344
        %348 = vset.pattern.permute.xlu0 0
        %349 = vperm.xlu0 %348, %v327
        %v350 = vpop.permute.xlu0 %349
        %353 = vset.pattern.permute.xlu0 0
        %354 = vperm.xlu0 %353, %v328
        %v355 = vpop.permute.xlu0 %354
        %358 = vset.pattern.permute.xlu0 0
        %359 = vperm.xlu0 %358, %v329
        %v360 = vpop.permute.xlu0 %359
        %363 = vset.pattern.permute.xlu0 0
        %364 = vperm.xlu0 %363, %v330
        %v365 = vpop.permute.xlu0 %364
        %368 = vset.pattern.permute.xlu0 0
        %369 = vperm.xlu0 %368, %v331
        %v370 = vpop.permute.xlu0 %369
        %v372 = vadd.f32 %v308, %v335
        %v373 = vadd.f32 %v309, %v335
        %v374 = vadd.f32 %v310, %v340
        %v375 = vadd.f32 %v311, %v340
        %v376 = vadd.f32 %v312, %v345
        %v377 = vadd.f32 %v313, %v345
        %v378 = vadd.f32 %v314, %v350
        %v379 = vadd.f32 %v315, %v350
        %v380 = vadd.f32 %v316, %v355
        %v381 = vadd.f32 %v317, %v355
        %v382 = vadd.f32 %v318, %v360
        %v383 = vadd.f32 %v319, %v360
        %v384 = vadd.f32 %v320, %v365
        %v385 = vadd.f32 %v321, %v365
        %v386 = vadd.f32 %v322, %v370
        %v387 = vadd.f32 %v323, %v370
        %v388 = vlaneseq
        %v389 = vand.u32 %v388, 127
        %v390 = vadd.s32 %v389, 128
        %vm391 = vcmp.ge.s32.totalorder %v389, 4
        %vm392 = vcmp.ge.s32.totalorder %v390, 4
        %393 = vrot.lane.b32.xlu0 %v372, 4
        %v394 = vpop.permute.xlu0 %393
        %395 = vrot.lane.b32.xlu0 %v374, 4
        %v396 = vpop.permute.xlu0 %395
        %397 = vrot.lane.b32.xlu0 %v376, 4
        %v398 = vpop.permute.xlu0 %397
        %399 = vrot.lane.b32.xlu0 %v378, 4
        %v400 = vpop.permute.xlu0 %399
        %401 = vrot.lane.b32.xlu0 %v380, 4
        %v402 = vpop.permute.xlu0 %401
        %403 = vrot.lane.b32.xlu0 %v382, 4
        %v404 = vpop.permute.xlu0 %403
        %405 = vrot.lane.b32.xlu0 %v384, 4
        %v406 = vpop.permute.xlu0 %405
        %407 = vrot.lane.b32.xlu0 %v386, 4
        %v408 = vpop.permute.xlu0 %407
        %409 = vrot.lane.b32.xlu0 %v373, 4
        %v410 = vpop.permute.xlu0 %409
        %411 = vrot.lane.b32.xlu0 %v375, 4
        %v412 = vpop.permute.xlu0 %411
        %413 = vrot.lane.b32.xlu0 %v377, 4
        %v414 = vpop.permute.xlu0 %413
        %415 = vrot.lane.b32.xlu0 %v379, 4
        %v416 = vpop.permute.xlu0 %415
        %417 = vrot.lane.b32.xlu0 %v381, 4
        %v418 = vpop.permute.xlu0 %417
        %419 = vrot.lane.b32.xlu0 %v383, 4
        %v420 = vpop.permute.xlu0 %419
        %421 = vrot.lane.b32.xlu0 %v385, 4
        %v422 = vpop.permute.xlu0 %421
        %423 = vrot.lane.b32.xlu0 %v387, 4
        %v424 = vpop.permute.xlu0 %423
        %vm425 = vcmp.lt.s32.totalorder %v389, 4
        %v426 = vsel %vm425, %v394, %v410
        %v427 = vsel %vm425, %v396, %v412
        %v428 = vsel %vm425, %v398, %v414
        %v429 = vsel %vm425, %v400, %v416
        %v430 = vsel %vm425, %v402, %v418
        %v431 = vsel %vm425, %v404, %v420
        %v432 = vsel %vm425, %v406, %v422
        %v433 = vsel %vm425, %v408, %v424
        %v434 = vsel %vm425, %v410, %v394
        %v435 = vsel %vm425, %v412, %v396
        %v436 = vsel %vm425, %v414, %v398
        %v437 = vsel %vm425, %v416, %v400
        %v438 = vsel %vm425, %v418, %v402
        %v439 = vsel %vm425, %v420, %v404
        %v440 = vsel %vm425, %v422, %v406
        %v441 = vsel %vm425, %v424, %v408
        %v442 = vsel %vm391, %v434, 0.0
        %v443 = vsel %vm392, %v426, 0.0
        %v444 = vsel %vm391, %v435, 0.0
        %v445 = vsel %vm392, %v427, 0.0
        %v446 = vsel %vm391, %v436, 0.0
        %v447 = vsel %vm392, %v428, 0.0
        %v448 = vsel %vm391, %v437, 0.0
        %v449 = vsel %vm392, %v429, 0.0
        %v450 = vsel %vm391, %v438, 0.0
        %v451 = vsel %vm392, %v430, 0.0
        %v452 = vsel %vm391, %v439, 0.0
        %v453 = vsel %vm392, %v431, 0.0
        %v454 = vsel %vm391, %v440, 0.0
        %v455 = vsel %vm392, %v432, 0.0
        %v456 = vsel %vm391, %v441, 0.0
        %v457 = vsel %vm392, %v433, 0.0
        %vm458 = vcmp.lt.s32.totalorder %v389, 252
        %vm459 = vcmp.lt.s32.totalorder %v390, 252
        %460 = vrot.lane.b32.xlu0 %v372, 124
        %v461 = vpop.permute.xlu0 %460
        %462 = vrot.lane.b32.xlu0 %v374, 124
        %v463 = vpop.permute.xlu0 %462
        %464 = vrot.lane.b32.xlu0 %v376, 124
        %v465 = vpop.permute.xlu0 %464
        %466 = vrot.lane.b32.xlu0 %v378, 124
        %v467 = vpop.permute.xlu0 %466
        %468 = vrot.lane.b32.xlu0 %v380, 124
        %v469 = vpop.permute.xlu0 %468
        %470 = vrot.lane.b32.xlu0 %v382, 124
        %v471 = vpop.permute.xlu0 %470
        %472 = vrot.lane.b32.xlu0 %v384, 124
        %v473 = vpop.permute.xlu0 %472
        %474 = vrot.lane.b32.xlu0 %v386, 124
        %v475 = vpop.permute.xlu0 %474
        %476 = vrot.lane.b32.xlu0 %v373, 124
        %v477 = vpop.permute.xlu0 %476
        %478 = vrot.lane.b32.xlu0 %v375, 124
        %v479 = vpop.permute.xlu0 %478
        %480 = vrot.lane.b32.xlu0 %v377, 124
        %v481 = vpop.permute.xlu0 %480
        %482 = vrot.lane.b32.xlu0 %v379, 124
        %v483 = vpop.permute.xlu0 %482
        %484 = vrot.lane.b32.xlu0 %v381, 124
        %v485 = vpop.permute.xlu0 %484
        %486 = vrot.lane.b32.xlu0 %v383, 124
        %v487 = vpop.permute.xlu0 %486
        %488 = vrot.lane.b32.xlu0 %v385, 124
        %v489 = vpop.permute.xlu0 %488
        %490 = vrot.lane.b32.xlu0 %v387, 124
        %v491 = vpop.permute.xlu0 %490
        %vm492 = vcmp.lt.s32.totalorder %v389, 124
        %v493 = vsel %vm492, %v461, %v477
        %v494 = vsel %vm492, %v463, %v479
        %v495 = vsel %vm492, %v465, %v481
        %v496 = vsel %vm492, %v467, %v483
        %v497 = vsel %vm492, %v469, %v485
        %v498 = vsel %vm492, %v471, %v487
        %v499 = vsel %vm492, %v473, %v489
        %v500 = vsel %vm492, %v475, %v491
        %v501 = vsel %vm492, %v477, %v461
        %v502 = vsel %vm492, %v479, %v463
        %v503 = vsel %vm492, %v481, %v465
        %v504 = vsel %vm492, %v483, %v467
        %v505 = vsel %vm492, %v485, %v469
        %v506 = vsel %vm492, %v487, %v471
        %v507 = vsel %vm492, %v489, %v473
        %v508 = vsel %vm492, %v491, %v475
        %v509 = vsel %vm458, %v493, 0.0
        %v510 = vsel %vm459, %v501, 0.0
        %v511 = vsel %vm458, %v494, 0.0
        %v512 = vsel %vm459, %v502, 0.0
        %v513 = vsel %vm458, %v495, 0.0
        %v514 = vsel %vm459, %v503, 0.0
        %v515 = vsel %vm458, %v496, 0.0
        %v516 = vsel %vm459, %v504, 0.0
        %v517 = vsel %vm458, %v497, 0.0
        %v518 = vsel %vm459, %v505, 0.0
        %v519 = vsel %vm458, %v498, 0.0
        %v520 = vsel %vm459, %v506, 0.0
        %v521 = vsel %vm458, %v499, 0.0
        %v522 = vsel %vm459, %v507, 0.0
        %v523 = vsel %vm458, %v500, 0.0
        %v524 = vsel %vm459, %v508, 0.0
        %v525 = vld [vmem:[%s2] sm:$0xff]
        %v526 = vld [vmem:[%s2 + $0x8] sm:$0xff]
        %v527 = vld [vmem:[%s2 + $0x10] sm:$0xff]
        %v528 = vld [vmem:[%s2 + $0x18] sm:$0xff]
        %v529 = vld [vmem:[%s2 + $0x20] sm:$0xff]
        %v530 = vld [vmem:[%s2 + $0x28] sm:$0xff]
        %v531 = vld [vmem:[%s2 + $0x30] sm:$0xff]
        %v532 = vld [vmem:[%s2 + $0x38] sm:$0xff]
        %v533 = vld [vmem:[%s2 + $0x40] sm:$0xff]
        %v534 = vld [vmem:[%s2 + $0x48] sm:$0xff]
        %v535 = vld [vmem:[%s2 + $0x50] sm:$0xff]
        %v536 = vld [vmem:[%s2 + $0x58] sm:$0xff]
        %v537 = vld [vmem:[%s2 + $0x60] sm:$0xff]
        %v538 = vld [vmem:[%s2 + $0x68] sm:$0xff]
        %v539 = vld [vmem:[%s2 + $0x70] sm:$0xff]
        %v540 = vld [vmem:[%s2 + $0x78] sm:$0xff]
        %v541 = vld [vmem:[%s2 + $0x80] sm:$0xff]
        %v542 = vld [vmem:[%s2 + $0x88] sm:$0xff]
        %v543 = vld [vmem:[%s2 + $0x90] sm:$0xff]
        %v544 = vld [vmem:[%s2 + $0x98] sm:$0xff]
        %v545 = vld [vmem:[%s2 + $0xa0] sm:$0xff]
        %v546 = vld [vmem:[%s2 + $0xa8] sm:$0xff]
        %v547 = vld [vmem:[%s2 + $0xb0] sm:$0xff]
        %v548 = vld [vmem:[%s2 + $0xb8] sm:$0xff]
        %v549 = vld [vmem:[%s2 + $0xc0] sm:$0xff]
        %v550 = vld [vmem:[%s2 + $0xc8] sm:$0xff]
        %v551 = vld [vmem:[%s2 + $0xd0] sm:$0xff]
        %v552 = vld [vmem:[%s2 + $0xd8] sm:$0xff]
        %v553 = vld [vmem:[%s2 + $0xe0] sm:$0xff]
        %v554 = vld [vmem:[%s2 + $0xe8] sm:$0xff]
        %v555 = vld [vmem:[%s2 + $0xf0] sm:$0xff]
        %v556 = vld [vmem:[%s2 + $0xf8] sm:$0xff]
        %v557 = vld [vmem:[%s3] sm:$0xff]
        %v558 = vld [vmem:[%s3 + $0x8] sm:$0xff]
        %v559 = vld [vmem:[%s3 + $0x10] sm:$0xff]
        %v560 = vld [vmem:[%s3 + $0x18] sm:$0xff]
        %v561 = vld [vmem:[%s3 + $0x20] sm:$0xff]
        %v562 = vld [vmem:[%s3 + $0x28] sm:$0xff]
        %v563 = vld [vmem:[%s3 + $0x30] sm:$0xff]
        %v564 = vld [vmem:[%s3 + $0x38] sm:$0xff]
        %v565 = vld [vmem:[%s3 + $0x40] sm:$0xff]
        %v566 = vld [vmem:[%s3 + $0x48] sm:$0xff]
        %v567 = vld [vmem:[%s3 + $0x50] sm:$0xff]
        %v568 = vld [vmem:[%s3 + $0x58] sm:$0xff]
        %v569 = vld [vmem:[%s3 + $0x60] sm:$0xff]
        %v570 = vld [vmem:[%s3 + $0x68] sm:$0xff]
        %v571 = vld [vmem:[%s3 + $0x70] sm:$0xff]
        %v572 = vld [vmem:[%s3 + $0x78] sm:$0xff]
        %574 = vset.pattern.permute.xlu0 0
        %575 = vperm.xlu0 %574, %v557
        %v576 = vpop.permute.xlu0 %575
        %579 = vset.pattern.permute.xlu0 0
        %580 = vperm.xlu0 %579, %v558
        %v581 = vpop.permute.xlu0 %580
        %584 = vset.pattern.permute.xlu0 0
        %585 = vperm.xlu0 %584, %v559
        %v586 = vpop.permute.xlu0 %585
        %589 = vset.pattern.permute.xlu0 0
        %590 = vperm.xlu0 %589, %v560
        %v591 = vpop.permute.xlu0 %590
        %594 = vset.pattern.permute.xlu0 0
        %595 = vperm.xlu0 %594, %v561
        %v596 = vpop.permute.xlu0 %595
        %599 = vset.pattern.permute.xlu0 0
        %600 = vperm.xlu0 %599, %v562
        %v601 = vpop.permute.xlu0 %600
        %604 = vset.pattern.permute.xlu0 0
        %605 = vperm.xlu0 %604, %v563
        %v606 = vpop.permute.xlu0 %605
        %609 = vset.pattern.permute.xlu0 0
        %610 = vperm.xlu0 %609, %v564
        %v611 = vpop.permute.xlu0 %610
        %614 = vset.pattern.permute.xlu0 0
        %615 = vperm.xlu0 %614, %v565
        %v616 = vpop.permute.xlu0 %615
        %619 = vset.pattern.permute.xlu0 0
        %620 = vperm.xlu0 %619, %v566
        %v621 = vpop.permute.xlu0 %620
        %624 = vset.pattern.permute.xlu0 0
        %625 = vperm.xlu0 %624, %v567
        %v626 = vpop.permute.xlu0 %625
        %629 = vset.pattern.permute.xlu0 0
        %630 = vperm.xlu0 %629, %v568
        %v631 = vpop.permute.xlu0 %630
        %634 = vset.pattern.permute.xlu0 0
        %635 = vperm.xlu0 %634, %v569
        %v636 = vpop.permute.xlu0 %635
        %639 = vset.pattern.permute.xlu0 0
        %640 = vperm.xlu0 %639, %v570
        %v641 = vpop.permute.xlu0 %640
        %644 = vset.pattern.permute.xlu0 0
        %645 = vperm.xlu0 %644, %v571
        %v646 = vpop.permute.xlu0 %645
        %649 = vset.pattern.permute.xlu0 0
        %650 = vperm.xlu0 %649, %v572
        %v651 = vpop.permute.xlu0 %650
        %vm653 = vcmask 523264
        %v655 = vsel %vm653, %v526, 0
        %v658 = vsel %vm653, %v528, 0
        %v661 = vsel %vm653, %v530, 0
        %v664 = vsel %vm653, %v532, 0
        %v667 = vsel %vm653, %v534, 0
        %v670 = vsel %vm653, %v536, 0
        %v673 = vsel %vm653, %v538, 0
        %v676 = vsel %vm653, %v540, 0
        %v679 = vsel %vm653, %v542, 0
        %v682 = vsel %vm653, %v544, 0
        %v685 = vsel %vm653, %v546, 0
        %v688 = vsel %vm653, %v548, 0
        %v691 = vsel %vm653, %v550, 0
        %v694 = vsel %vm653, %v552, 0
        %v697 = vsel %vm653, %v554, 0
        %v700 = vsel %vm653, %v556, 0
        %702 = vmatprep.subr.mxu0 %v443
        %703 = vmatpush1.msra.mxu0 %v442
        %704 = vmatprep.subr.mxu0 %v445
        %705 = vmatpush1.msra.mxu0 %v444
        %706 = vmatprep.subr.mxu0 %v447
        %707 = vmatpush1.msra.mxu0 %v446
        %708 = vmatprep.subr.mxu0 %v449
        %709 = vmatpush1.msra.mxu0 %v448
        %710 = vmatprep.subr.mxu0 %v451
        %711 = vmatpush1.msra.mxu0 %v450
        %712 = vmatprep.subr.mxu0 %v453
        %713 = vmatpush1.msra.mxu0 %v452
        %714 = vmatprep.subr.mxu0 %v455
        %715 = vmatpush1.msra.mxu0 %v454
        %716 = vmatprep.subr.mxu0 %v457
        %717 = vmatpush1.msra.mxu0 %v456
        %718 = vmatprep.subr.mxu0 %v373
        %719 = vmatpush1.msra.mxu0 %v372
        %720 = vmatprep.subr.mxu0 %v375
        %721 = vmatpush1.msra.mxu0 %v374
        %722 = vmatprep.subr.mxu0 %v377
        %723 = vmatpush1.msra.mxu0 %v376
        %724 = vmatprep.subr.mxu0 %v379
        %725 = vmatpush1.msra.mxu0 %v378
        %726 = vmatprep.subr.mxu0 %v381
        %727 = vmatpush1.msra.mxu0 %v380
        %728 = vmatprep.subr.mxu0 %v383
        %729 = vmatpush1.msra.mxu0 %v382
        %730 = vmatprep.subr.mxu0 %v385
        %731 = vmatpush1.msra.mxu0 %v384
        %732 = vmatprep.subr.mxu0 %v387
        %733 = vmatpush1.msra.mxu0 %v386
        %734 = vmatprep.subr.mxu0 %v510
        %735 = vmatpush1.msra.mxu0 %v509
        %736 = vmatprep.subr.mxu0 %v512
        %737 = vmatpush1.msra.mxu0 %v511
        %738 = vmatprep.subr.mxu0 %v514
        %739 = vmatpush1.msra.mxu0 %v513
        %740 = vmatprep.subr.mxu0 %v516
        %741 = vmatpush1.msra.mxu0 %v515
        %742 = vmatprep.subr.mxu0 %v518
        %743 = vmatpush1.msra.mxu0 %v517
        %744 = vmatprep.subr.mxu0 %v520
        %745 = vmatpush1.msra.mxu0 %v519
        %746 = vmatprep.subr.mxu0 %v522
        %747 = vmatpush1.msra.mxu0 %v521
        %748 = vmatprep.subr.mxu0 %v524
        %749 = vmatpush1.msra.mxu0 %v523
        %750 = vmatprep.subr.mxu0 0.0
        %751 = vmatpush1.msra.mxu0 0.0
        %752 = vmatprep.subr.mxu0 0.0
        %753 = vmatpush1.msra.mxu0 0.0
        %754 = vmatprep.subr.mxu0 0.0
        %755 = vmatpush1.msra.mxu0 0.0
        %756 = vmatprep.subr.mxu0 0.0
        %757 = vmatpush1.msra.mxu0 0.0
        %758 = vmatprep.subr.mxu0 0.0
        %759 = vmatpush1.msra.mxu0 0.0
        %760 = vmatprep.subr.mxu0 0.0
        %761 = vmatpush1.msra.mxu0 0.0
        %762 = vmatprep.subr.mxu0 0.0
        %763 = vmatpush1.msra.mxu0 0.0
        %764 = vmatprep.subr.mxu0 0.0
        %765 = vmatpush1.msra.mxu0 0.0
        %766 = vmatprep.mubr.f32.mxu0 %v655
        %767 = vmatmul.mubr.f32.gmra.mrb[0].mxu0 %v525
        %v768 = vpop.f32.mrb[0].mxu0
        %v769 = vadd.f32 %v576, %v768
        %v770 = vpop.f32.mrb[0].mxu0
        %v771 = vadd.f32 %v576, %v770
        %772 = vmatprep.mubr.f32.mxu0 %v658
        %773 = vmatmul.mubr.f32.gmra.mrb[0].mxu0 %v527
        %v774 = vpop.f32.mrb[0].mxu0
        %v775 = vadd.f32 %v581, %v774
        %v776 = vpop.f32.mrb[0].mxu0
        %v777 = vadd.f32 %v581, %v776
        %778 = vmatprep.mubr.f32.mxu0 %v661
        %779 = vmatmul.mubr.f32.gmra.mrb[0].mxu0 %v529
        %v780 = vpop.f32.mrb[0].mxu0
        %v781 = vadd.f32 %v586, %v780
        %v782 = vpop.f32.mrb[0].mxu0
        %v783 = vadd.f32 %v586, %v782
        %784 = vmatprep.mubr.f32.mxu0 %v664
        %785 = vmatmul.mubr.f32.gmra.mrb[0].mxu0 %v531
        %v786 = vpop.f32.mrb[0].mxu0
        %v787 = vadd.f32 %v591, %v786
        %v788 = vpop.f32.mrb[0].mxu0
        %v789 = vadd.f32 %v591, %v788
        %790 = vmatprep.mubr.f32.mxu0 %v667
        %791 = vmatmul.mubr.f32.gmra.mrb[0].mxu0 %v533
        %v792 = vpop.f32.mrb[0].mxu0
        %v793 = vadd.f32 %v596, %v792
        %v794 = vpop.f32.mrb[0].mxu0
        %v795 = vadd.f32 %v596, %v794
        %796 = vmatprep.mubr.f32.mxu0 %v670
        %797 = vmatmul.mubr.f32.gmra.mrb[0].mxu0 %v535
        %v798 = vpop.f32.mrb[0].mxu0
        %v799 = vadd.f32 %v601, %v798
        %v800 = vpop.f32.mrb[0].mxu0
        %v801 = vadd.f32 %v601, %v800
        %802 = vmatprep.mubr.f32.mxu0 %v673
        %803 = vmatmul.mubr.f32.gmra.mrb[0].mxu0 %v537
        %v804 = vpop.f32.mrb[0].mxu0
        %v805 = vadd.f32 %v606, %v804
        %v806 = vpop.f32.mrb[0].mxu0
        %v807 = vadd.f32 %v606, %v806
        %808 = vmatprep.mubr.f32.mxu0 %v676
        %809 = vmatmul.mubr.f32.gmra.mrb[0].mxu0 %v539
        %v810 = vpop.f32.mrb[0].mxu0
        %v811 = vadd.f32 %v611, %v810
        %v812 = vpop.f32.mrb[0].mxu0
        %v813 = vadd.f32 %v611, %v812
        %814 = vmatprep.mubr.f32.mxu0 %v679
        %815 = vmatmul.mubr.f32.gmra.mrb[0].mxu0 %v541
        %v816 = vpop.f32.mrb[0].mxu0
        %v817 = vadd.f32 %v616, %v816
        %v818 = vpop.f32.mrb[0].mxu0
        %v819 = vadd.f32 %v616, %v818
        %820 = vmatprep.mubr.f32.mxu0 %v682
        %821 = vmatmul.mubr.f32.gmra.mrb[0].mxu0 %v543
        %v822 = vpop.f32.mrb[0].mxu0
        %v823 = vadd.f32 %v621, %v822
        %v824 = vpop.f32.mrb[0].mxu0
        %v825 = vadd.f32 %v621, %v824
        %826 = vmatprep.mubr.f32.mxu0 %v685
        %827 = vmatmul.mubr.f32.gmra.mrb[0].mxu0 %v545
        %v828 = vpop.f32.mrb[0].mxu0
        %v829 = vadd.f32 %v626, %v828
        %v830 = vpop.f32.mrb[0].mxu0
        %v831 = vadd.f32 %v626, %v830
        %832 = vmatprep.mubr.f32.mxu0 %v688
        %833 = vmatmul.mubr.f32.gmra.mrb[0].mxu0 %v547
        %v834 = vpop.f32.mrb[0].mxu0
        %v835 = vadd.f32 %v631, %v834
        %v836 = vpop.f32.mrb[0].mxu0
        %v837 = vadd.f32 %v631, %v836
        %838 = vmatprep.mubr.f32.mxu0 %v691
        %839 = vmatmul.mubr.f32.gmra.mrb[0].mxu0 %v549
        %v840 = vpop.f32.mrb[0].mxu0
        %v841 = vadd.f32 %v636, %v840
        %v842 = vpop.f32.mrb[0].mxu0
        %v843 = vadd.f32 %v636, %v842
        %844 = vmatprep.mubr.f32.mxu0 %v694
        %845 = vmatmul.mubr.f32.gmra.mrb[0].mxu0 %v551
        %v846 = vpop.f32.mrb[0].mxu0
        %v847 = vadd.f32 %v641, %v846
        %v848 = vpop.f32.mrb[0].mxu0
        %v849 = vadd.f32 %v641, %v848
        %850 = vmatprep.mubr.f32.mxu0 %v697
        %851 = vmatmul.mubr.f32.gmra.mrb[0].mxu0 %v553
        %v852 = vpop.f32.mrb[0].mxu0
        %v853 = vadd.f32 %v646, %v852
        %v854 = vpop.f32.mrb[0].mxu0
        %v855 = vadd.f32 %v646, %v854
        %856 = vmatprep.mubr.f32.mxu0 %v700
        %857 = vmatmul.mubr.f32.gmra.mrb[0].mxu0 %v555
        %v858 = vpop.f32.mrb[0].mxu0
        %v859 = vadd.f32 %v651, %v858
        %v860 = vpop.f32.mrb[0].mxu0
        %v861 = vadd.f32 %v651, %v860
        %862 = vdwg.mxu0
        %v863 = vxor.u32 %v769, 2147483648
        %v864 = vxor.u32 %v771, 2147483648
        %v865 = vxor.u32 %v775, 2147483648
        %v866 = vxor.u32 %v777, 2147483648
        %v867 = vxor.u32 %v781, 2147483648
        %v868 = vxor.u32 %v783, 2147483648
        %v869 = vxor.u32 %v787, 2147483648
        %v870 = vxor.u32 %v789, 2147483648
        %v871 = vxor.u32 %v793, 2147483648
        %v872 = vxor.u32 %v795, 2147483648
        %v873 = vxor.u32 %v799, 2147483648
        %v874 = vxor.u32 %v801, 2147483648
        %v875 = vxor.u32 %v805, 2147483648
        %v876 = vxor.u32 %v807, 2147483648
        %v877 = vxor.u32 %v811, 2147483648
        %v878 = vxor.u32 %v813, 2147483648
        %v879 = vmul.f32 %v863, 1.442695
        %v880 = vpow.pop %v879
        %v881 = vmul.f32 %v864, 1.442695
        %v882 = vpow.pop %v881
        %v883 = vmul.f32 %v865, 1.442695
        %v884 = vpow.pop %v883
        %v885 = vmul.f32 %v866, 1.442695
        %v886 = vpow.pop %v885
        %v887 = vmul.f32 %v867, 1.442695
        %v888 = vpow.pop %v887
        %v889 = vmul.f32 %v868, 1.442695
        %v890 = vpow.pop %v889
        %v891 = vmul.f32 %v869, 1.442695
        %v892 = vpow.pop %v891
        %v893 = vmul.f32 %v870, 1.442695
        %v894 = vpow.pop %v893
        %v895 = vmul.f32 %v871, 1.442695
        %v896 = vpow.pop %v895
        %v897 = vmul.f32 %v872, 1.442695
        %v898 = vpow.pop %v897
        %v899 = vmul.f32 %v873, 1.442695
        %v900 = vpow.pop %v899
        %v901 = vmul.f32 %v874, 1.442695
        %v902 = vpow.pop %v901
        %v903 = vmul.f32 %v875, 1.442695
        %v904 = vpow.pop %v903
        %v905 = vmul.f32 %v876, 1.442695
        %v906 = vpow.pop %v905
        %v907 = vmul.f32 %v877, 1.442695
        %v908 = vpow.pop %v907
        %v909 = vmul.f32 %v878, 1.442695
        %v910 = vpow.pop %v909
        %v911 = vadd.f32 %v880, 1.0
        %v912 = vadd.f32 %v882, 1.0
        %v913 = vadd.f32 %v884, 1.0
        %v914 = vadd.f32 %v886, 1.0
        %v915 = vadd.f32 %v888, 1.0
        %v916 = vadd.f32 %v890, 1.0
        %v917 = vadd.f32 %v892, 1.0
        %v918 = vadd.f32 %v894, 1.0
        %v919 = vadd.f32 %v896, 1.0
        %v920 = vadd.f32 %v898, 1.0
        %v921 = vadd.f32 %v900, 1.0
        %v922 = vadd.f32 %v902, 1.0
        %v923 = vadd.f32 %v904, 1.0
        %v924 = vadd.f32 %v906, 1.0
        %v925 = vadd.f32 %v908, 1.0
        %v926 = vadd.f32 %v910, 1.0
        %v927 = vrcp.pop %v911
        %v928 = vmul.f32 1.0, %v927
        %v929 = vrcp.pop %v912
        %v930 = vmul.f32 1.0, %v929
        %v931 = vrcp.pop %v913
        %v932 = vmul.f32 1.0, %v931
        %v933 = vrcp.pop %v914
        %v934 = vmul.f32 1.0, %v933
        %v935 = vrcp.pop %v915
        %v936 = vmul.f32 1.0, %v935
        %v937 = vrcp.pop %v916
        %v938 = vmul.f32 1.0, %v937
        %v939 = vrcp.pop %v917
        %v940 = vmul.f32 1.0, %v939
        %v941 = vrcp.pop %v918
        %v942 = vmul.f32 1.0, %v941
        %v943 = vrcp.pop %v919
        %v944 = vmul.f32 1.0, %v943
        %v945 = vrcp.pop %v920
        %v946 = vmul.f32 1.0, %v945
        %v947 = vrcp.pop %v921
        %v948 = vmul.f32 1.0, %v947
        %v949 = vrcp.pop %v922
        %v950 = vmul.f32 1.0, %v949
        %v951 = vrcp.pop %v923
        %v952 = vmul.f32 1.0, %v951
        %v953 = vrcp.pop %v924
        %v954 = vmul.f32 1.0, %v953
        %v955 = vrcp.pop %v925
        %v956 = vmul.f32 1.0, %v955
        %v957 = vrcp.pop %v926
        %v958 = vmul.f32 1.0, %v957
        %v959 = vtanh.pop %v817
        %v960 = vtanh.pop %v819
        %v961 = vtanh.pop %v823
        %v962 = vtanh.pop %v825
        %v963 = vtanh.pop %v829
        %v964 = vtanh.pop %v831
        %v965 = vtanh.pop %v835
        %v966 = vtanh.pop %v837
        %v967 = vtanh.pop %v841
        %v968 = vtanh.pop %v843
        %v969 = vtanh.pop %v847
        %v970 = vtanh.pop %v849
        %v971 = vtanh.pop %v853
        %v972 = vtanh.pop %v855
        %v973 = vtanh.pop %v859
        %v974 = vtanh.pop %v861
        %v975 = vmul.f32 %v928, %v959
        %v976 = vmul.f32 %v930, %v960
        %v977 = vmul.f32 %v932, %v961
        %v978 = vmul.f32 %v934, %v962
        %v979 = vmul.f32 %v936, %v963
        %v980 = vmul.f32 %v938, %v964
        %v981 = vmul.f32 %v940, %v965
        %v982 = vmul.f32 %v942, %v966
        %v983 = vmul.f32 %v944, %v967
        %v984 = vmul.f32 %v946, %v968
        %v985 = vmul.f32 %v948, %v969
        %v986 = vmul.f32 %v950, %v970
        %v987 = vmul.f32 %v952, %v971
        %v988 = vmul.f32 %v954, %v972
        %v989 = vmul.f32 %v956, %v973
        %v990 = vmul.f32 %v958, %v974
        %v991 = vld [vmem:[%s4] sm:$0xff]
        %v992 = vld [vmem:[%s4 + $0x8] sm:$0xff]
        %v993 = vld [vmem:[%s4 + $0x10] sm:$0xff]
        %v994 = vld [vmem:[%s4 + $0x18] sm:$0xff]
        %v995 = vld [vmem:[%s4 + $0x20] sm:$0xff]
        %v996 = vld [vmem:[%s4 + $0x28] sm:$0xff]
        %v997 = vld [vmem:[%s4 + $0x30] sm:$0xff]
        %v998 = vld [vmem:[%s4 + $0x38] sm:$0xff]
        %v999 = vld [vmem:[%s4 + $0x40] sm:$0xff]
        %v1000 = vld [vmem:[%s4 + $0x48] sm:$0xff]
        %v1001 = vld [vmem:[%s4 + $0x50] sm:$0xff]
        %v1002 = vld [vmem:[%s4 + $0x58] sm:$0xff]
        %v1003 = vld [vmem:[%s4 + $0x60] sm:$0xff]
        %v1004 = vld [vmem:[%s4 + $0x68] sm:$0xff]
        %v1005 = vld [vmem:[%s4 + $0x70] sm:$0xff]
        %v1006 = vld [vmem:[%s4 + $0x78] sm:$0xff]
        %v1007 = vld [vmem:[%s5] sm:$0xff]
        %v1008 = vld [vmem:[%s5 + $0x8] sm:$0xff]
        %v1009 = vld [vmem:[%s5 + $0x10] sm:$0xff]
        %v1010 = vld [vmem:[%s5 + $0x18] sm:$0xff]
        %v1011 = vld [vmem:[%s5 + $0x20] sm:$0xff]
        %v1012 = vld [vmem:[%s5 + $0x28] sm:$0xff]
        %v1013 = vld [vmem:[%s5 + $0x30] sm:$0xff]
        %v1014 = vld [vmem:[%s5 + $0x38] sm:$0xff]
        %v1015 = vld [vmem:[%s5 + $0x40] sm:$0xff]
        %v1016 = vld [vmem:[%s5 + $0x48] sm:$0xff]
        %v1017 = vld [vmem:[%s5 + $0x50] sm:$0xff]
        %v1018 = vld [vmem:[%s5 + $0x58] sm:$0xff]
        %v1019 = vld [vmem:[%s5 + $0x60] sm:$0xff]
        %v1020 = vld [vmem:[%s5 + $0x68] sm:$0xff]
        %v1021 = vld [vmem:[%s5 + $0x70] sm:$0xff]
        %v1022 = vld [vmem:[%s5 + $0x78] sm:$0xff]
        %1024 = vset.pattern.permute.xlu0 0
        %1025 = vperm.xlu0 %1024, %v1007
        %v1026 = vpop.permute.xlu0 %1025
        %1029 = vset.pattern.permute.xlu0 0
        %1030 = vperm.xlu0 %1029, %v1008
        %v1031 = vpop.permute.xlu0 %1030
        %1034 = vset.pattern.permute.xlu0 0
        %1035 = vperm.xlu0 %1034, %v1009
        %v1036 = vpop.permute.xlu0 %1035
        %1039 = vset.pattern.permute.xlu0 0
        %1040 = vperm.xlu0 %1039, %v1010
        %v1041 = vpop.permute.xlu0 %1040
        %1044 = vset.pattern.permute.xlu0 0
        %1045 = vperm.xlu0 %1044, %v1011
        %v1046 = vpop.permute.xlu0 %1045
        %1049 = vset.pattern.permute.xlu0 0
        %1050 = vperm.xlu0 %1049, %v1012
        %v1051 = vpop.permute.xlu0 %1050
        %1054 = vset.pattern.permute.xlu0 0
        %1055 = vperm.xlu0 %1054, %v1013
        %v1056 = vpop.permute.xlu0 %1055
        %1059 = vset.pattern.permute.xlu0 0
        %1060 = vperm.xlu0 %1059, %v1014
        %v1061 = vpop.permute.xlu0 %1060
        %1064 = vset.pattern.permute.xlu0 0
        %1065 = vperm.xlu0 %1064, %v1015
        %v1066 = vpop.permute.xlu0 %1065
        %1069 = vset.pattern.permute.xlu0 0
        %1070 = vperm.xlu0 %1069, %v1016
        %v1071 = vpop.permute.xlu0 %1070
        %1074 = vset.pattern.permute.xlu0 0
        %1075 = vperm.xlu0 %1074, %v1017
        %v1076 = vpop.permute.xlu0 %1075
        %1079 = vset.pattern.permute.xlu0 0
        %1080 = vperm.xlu0 %1079, %v1018
        %v1081 = vpop.permute.xlu0 %1080
        %1084 = vset.pattern.permute.xlu0 0
        %1085 = vperm.xlu0 %1084, %v1019
        %v1086 = vpop.permute.xlu0 %1085
        %1089 = vset.pattern.permute.xlu0 0
        %1090 = vperm.xlu0 %1089, %v1020
        %v1091 = vpop.permute.xlu0 %1090
        %1094 = vset.pattern.permute.xlu0 0
        %1095 = vperm.xlu0 %1094, %v1021
        %v1096 = vpop.permute.xlu0 %1095
        %1099 = vset.pattern.permute.xlu0 0
        %1100 = vperm.xlu0 %1099, %v1022
        %v1101 = vpop.permute.xlu0 %1100
        %v1104 = vsel %vm653, %v991, 0
        %v1107 = vsel %vm653, %v992, 0
        %v1110 = vsel %vm653, %v993, 0
        %v1113 = vsel %vm653, %v994, 0
        %v1116 = vsel %vm653, %v995, 0
        %v1119 = vsel %vm653, %v996, 0
        %v1122 = vsel %vm653, %v997, 0
        %v1125 = vsel %vm653, %v998, 0
        %v1128 = vsel %vm653, %v999, 0
        %v1131 = vsel %vm653, %v1000, 0
        %v1134 = vsel %vm653, %v1001, 0
        %v1137 = vsel %vm653, %v1002, 0
        %v1140 = vsel %vm653, %v1003, 0
        %v1143 = vsel %vm653, %v1004, 0
        %v1146 = vsel %vm653, %v1005, 0
        %v1149 = vsel %vm653, %v1006, 0
        %1151 = vmatprep.subr.mxu0 %v976
        %1152 = vmatpush1.msra.mxu0 %v975
        %1153 = vmatprep.subr.mxu0 %v978
        %1154 = vmatpush1.msra.mxu0 %v977
        %1155 = vmatprep.subr.mxu0 %v980
        %1156 = vmatpush1.msra.mxu0 %v979
        %1157 = vmatprep.subr.mxu0 %v982
        %1158 = vmatpush1.msra.mxu0 %v981
        %1159 = vmatprep.subr.mxu0 %v984
        %1160 = vmatpush1.msra.mxu0 %v983
        %1161 = vmatprep.subr.mxu0 %v986
        %1162 = vmatpush1.msra.mxu0 %v985
        %1163 = vmatprep.subr.mxu0 %v988
        %1164 = vmatpush1.msra.mxu0 %v987
        %1165 = vmatprep.subr.mxu0 %v990
        %1166 = vmatpush1.msra.mxu0 %v989
        %1167 = vmatprep.subr.mxu0 0.0
        %1168 = vmatpush1.msra.mxu0 0.0
        %1169 = vmatprep.subr.mxu0 0.0
        %1170 = vmatpush1.msra.mxu0 0.0
        %1171 = vmatprep.subr.mxu0 0.0
        %1172 = vmatpush1.msra.mxu0 0.0
        %1173 = vmatprep.subr.mxu0 0.0
        %1174 = vmatpush1.msra.mxu0 0.0
        %1175 = vmatprep.subr.mxu0 0.0
        %1176 = vmatpush1.msra.mxu0 0.0
        %1177 = vmatprep.subr.mxu0 0.0
        %1178 = vmatpush1.msra.mxu0 0.0
        %1179 = vmatprep.subr.mxu0 0.0
        %1180 = vmatpush1.msra.mxu0 0.0
        %1181 = vmatprep.subr.mxu0 0.0
        %1182 = vmatpush1.msra.mxu0 0.0
        %1183 = vmatprep.subr.mxu0 0.0
        %1184 = vmatpush1.msra.mxu0 0.0
        %1185 = vmatprep.subr.mxu0 0.0
        %1186 = vmatpush1.msra.mxu0 0.0
        %1187 = vmatprep.subr.mxu0 0.0
        %1188 = vmatpush1.msra.mxu0 0.0
        %1189 = vmatprep.subr.mxu0 0.0
        %1190 = vmatpush1.msra.mxu0 0.0
        %1191 = vmatprep.subr.mxu0 0.0
        %1192 = vmatpush1.msra.mxu0 0.0
        %1193 = vmatprep.subr.mxu0 0.0
        %1194 = vmatpush1.msra.mxu0 0.0
        %1195 = vmatprep.subr.mxu0 0.0
        %1196 = vmatpush1.msra.mxu0 0.0
        %1197 = vmatprep.subr.mxu0 0.0
        %1198 = vmatpush1.msra.mxu0 0.0
        %1199 = vmatprep.subr.mxu0 0.0
        %1200 = vmatpush1.msra.mxu0 0.0
        %1201 = vmatprep.subr.mxu0 0.0
        %1202 = vmatpush1.msra.mxu0 0.0
        %1203 = vmatprep.subr.mxu0 0.0
        %1204 = vmatpush1.msra.mxu0 0.0
        %1205 = vmatprep.subr.mxu0 0.0
        %1206 = vmatpush1.msra.mxu0 0.0
        %1207 = vmatprep.subr.mxu0 0.0
        %1208 = vmatpush1.msra.mxu0 0.0
        %1209 = vmatprep.subr.mxu0 0.0
        %1210 = vmatpush1.msra.mxu0 0.0
        %1211 = vmatprep.subr.mxu0 0.0
        %1212 = vmatpush1.msra.mxu0 0.0
        %1213 = vmatprep.subr.mxu0 0.0
        %1214 = vmatpush1.msra.mxu0 0.0
        %1215 = vmatprep.mubr.f32.mxu0 0.0
        %1216 = vmatmul.mubr.f32.gmra.mrb[0].mxu0 %v1104
        %v1217 = vpop.f32.mrb[0].mxu0
        %v1218 = vadd.f32 %v1026, %v1217
        %v1219 = vpop.f32.mrb[0].mxu0
        %v1220 = vadd.f32 %v1026, %v1219
        %1221 = vmatprep.mubr.f32.mxu0 0.0
        %1222 = vmatmul.mubr.f32.gmra.mrb[0].mxu0 %v1107
        %v1223 = vpop.f32.mrb[0].mxu0
        %v1224 = vadd.f32 %v1031, %v1223
        %v1225 = vpop.f32.mrb[0].mxu0
        %v1226 = vadd.f32 %v1031, %v1225
        %1227 = vmatprep.mubr.f32.mxu0 0.0
        %1228 = vmatmul.mubr.f32.gmra.mrb[0].mxu0 %v1110
        %v1229 = vpop.f32.mrb[0].mxu0
        %v1230 = vadd.f32 %v1036, %v1229
        %v1231 = vpop.f32.mrb[0].mxu0
        %v1232 = vadd.f32 %v1036, %v1231
        %1233 = vmatprep.mubr.f32.mxu0 0.0
        %1234 = vmatmul.mubr.f32.gmra.mrb[0].mxu0 %v1113
        %v1235 = vpop.f32.mrb[0].mxu0
        %v1236 = vadd.f32 %v1041, %v1235
        %v1237 = vpop.f32.mrb[0].mxu0
        %v1238 = vadd.f32 %v1041, %v1237
        %1239 = vmatprep.mubr.f32.mxu0 0.0
        %1240 = vmatmul.mubr.f32.gmra.mrb[0].mxu0 %v1116
        %v1241 = vpop.f32.mrb[0].mxu0
        %v1242 = vadd.f32 %v1046, %v1241
        %v1243 = vpop.f32.mrb[0].mxu0
        %v1244 = vadd.f32 %v1046, %v1243
        %1245 = vmatprep.mubr.f32.mxu0 0.0
        %1246 = vmatmul.mubr.f32.gmra.mrb[0].mxu0 %v1119
        %v1247 = vpop.f32.mrb[0].mxu0
        %v1248 = vadd.f32 %v1051, %v1247
        %v1249 = vpop.f32.mrb[0].mxu0
        %v1250 = vadd.f32 %v1051, %v1249
        %1251 = vmatprep.mubr.f32.mxu0 0.0
        %1252 = vmatmul.mubr.f32.gmra.mrb[0].mxu0 %v1122
        %v1253 = vpop.f32.mrb[0].mxu0
        %v1254 = vadd.f32 %v1056, %v1253
        %v1255 = vpop.f32.mrb[0].mxu0
        %v1256 = vadd.f32 %v1056, %v1255
        %1257 = vmatprep.mubr.f32.mxu0 0.0
        %1258 = vmatmul.mubr.f32.gmra.mrb[0].mxu0 %v1125
        %v1259 = vpop.f32.mrb[0].mxu0
        %v1260 = vadd.f32 %v1061, %v1259
        %v1261 = vpop.f32.mrb[0].mxu0
        %v1262 = vadd.f32 %v1061, %v1261
        %1263 = vmatprep.mubr.f32.mxu0 0.0
        %1264 = vmatmul.mubr.f32.gmra.mrb[0].mxu0 %v1128
        %v1265 = vpop.f32.mrb[0].mxu0
        %v1266 = vadd.f32 %v1066, %v1265
        %v1267 = vpop.f32.mrb[0].mxu0
        %v1268 = vadd.f32 %v1066, %v1267
        %1269 = vmatprep.mubr.f32.mxu0 0.0
        %1270 = vmatmul.mubr.f32.gmra.mrb[0].mxu0 %v1131
        %v1271 = vpop.f32.mrb[0].mxu0
        %v1272 = vadd.f32 %v1071, %v1271
        %v1273 = vpop.f32.mrb[0].mxu0
        %v1274 = vadd.f32 %v1071, %v1273
        %1275 = vmatprep.mubr.f32.mxu0 0.0
        %1276 = vmatmul.mubr.f32.gmra.mrb[0].mxu0 %v1134
        %v1277 = vpop.f32.mrb[0].mxu0
        %v1278 = vadd.f32 %v1076, %v1277
        %v1279 = vpop.f32.mrb[0].mxu0
        %v1280 = vadd.f32 %v1076, %v1279
        %1281 = vmatprep.mubr.f32.mxu0 0.0
        %1282 = vmatmul.mubr.f32.gmra.mrb[0].mxu0 %v1137
        %v1283 = vpop.f32.mrb[0].mxu0
        %v1284 = vadd.f32 %v1081, %v1283
        %v1285 = vpop.f32.mrb[0].mxu0
        %v1286 = vadd.f32 %v1081, %v1285
        %1287 = vmatprep.mubr.f32.mxu0 0.0
        %1288 = vmatmul.mubr.f32.gmra.mrb[0].mxu0 %v1140
        %v1289 = vpop.f32.mrb[0].mxu0
        %v1290 = vadd.f32 %v1086, %v1289
        %v1291 = vpop.f32.mrb[0].mxu0
        %v1292 = vadd.f32 %v1086, %v1291
        %1293 = vmatprep.mubr.f32.mxu0 0.0
        %1294 = vmatmul.mubr.f32.gmra.mrb[0].mxu0 %v1143
        %v1295 = vpop.f32.mrb[0].mxu0
        %v1296 = vadd.f32 %v1091, %v1295
        %v1297 = vpop.f32.mrb[0].mxu0
        %v1298 = vadd.f32 %v1091, %v1297
        %1299 = vmatprep.mubr.f32.mxu0 0.0
        %1300 = vmatmul.mubr.f32.gmra.mrb[0].mxu0 %v1146
        %v1301 = vpop.f32.mrb[0].mxu0
        %v1302 = vadd.f32 %v1096, %v1301
        %v1303 = vpop.f32.mrb[0].mxu0
        %v1304 = vadd.f32 %v1096, %v1303
        %1305 = vmatprep.mubr.f32.mxu0 0.0
        %1306 = vmatmul.mubr.f32.gmra.mrb[0].mxu0 %v1149
        %v1307 = vpop.f32.mrb[0].mxu0
        %v1308 = vadd.f32 %v1101, %v1307
        %v1309 = vpop.f32.mrb[0].mxu0
        %v1310 = vadd.f32 %v1101, %v1309
        %1311 = vdwg.mxu0
        %v1312 = vadd.f32 %v308, %v1218
        %v1313 = vadd.f32 %v309, %v1220
        %v1314 = vadd.f32 %v310, %v1224
        %v1315 = vadd.f32 %v311, %v1226
        %v1316 = vadd.f32 %v312, %v1230
        %v1317 = vadd.f32 %v313, %v1232
        %v1318 = vadd.f32 %v314, %v1236
        %v1319 = vadd.f32 %v315, %v1238
        %v1320 = vadd.f32 %v316, %v1242
        %v1321 = vadd.f32 %v317, %v1244
        %v1322 = vadd.f32 %v318, %v1248
        %v1323 = vadd.f32 %v319, %v1250
        %v1324 = vadd.f32 %v320, %v1254
        %v1325 = vadd.f32 %v321, %v1256
        %v1326 = vadd.f32 %v322, %v1260
        %v1327 = vadd.f32 %v323, %v1262
        %v1328 = vmul.f32 %v1312, 0.70710677
        %v1329 = vmul.f32 %v1313, 0.70710677
        %v1330 = vmul.f32 %v1314, 0.70710677
        %v1331 = vmul.f32 %v1315, 0.70710677
        %v1332 = vmul.f32 %v1316, 0.70710677
        %v1333 = vmul.f32 %v1317, 0.70710677
        %v1334 = vmul.f32 %v1318, 0.70710677
        %v1335 = vmul.f32 %v1319, 0.70710677
        %v1336 = vmul.f32 %v1320, 0.70710677
        %v1337 = vmul.f32 %v1321, 0.70710677
        %v1338 = vmul.f32 %v1322, 0.70710677
        %v1339 = vmul.f32 %v1323, 0.70710677
        %v1340 = vmul.f32 %v1324, 0.70710677
        %v1341 = vmul.f32 %v1325, 0.70710677
        %v1342 = vmul.f32 %v1326, 0.70710677
        %v1343 = vmul.f32 %v1327, 0.70710677
        %1344 = vst [vmem:[%s290] sm:$0xff] %v1328
        %1345 = vst [vmem:[%s290 + $0x8] sm:$0xff] %v1329
        %1346 = vst [vmem:[%s290 + $0x10] sm:$0xff] %v1330
        %1347 = vst [vmem:[%s290 + $0x18] sm:$0xff] %v1331
        %1348 = vst [vmem:[%s290 + $0x20] sm:$0xff] %v1332
        %1349 = vst [vmem:[%s290 + $0x28] sm:$0xff] %v1333
        %1350 = vst [vmem:[%s290 + $0x30] sm:$0xff] %v1334
        %1351 = vst [vmem:[%s290 + $0x38] sm:$0xff] %v1335
        %1352 = vst [vmem:[%s290 + $0x40] sm:$0xff] %v1336
        %1353 = vst [vmem:[%s290 + $0x48] sm:$0xff] %v1337
        %1354 = vst [vmem:[%s290 + $0x50] sm:$0xff] %v1338
        %1355 = vst [vmem:[%s290 + $0x58] sm:$0xff] %v1339
        %1356 = vst [vmem:[%s290 + $0x60] sm:$0xff] %v1340
        %1357 = vst [vmem:[%s290 + $0x68] sm:$0xff] %v1341
        %1358 = vst [vmem:[%s290 + $0x70] sm:$0xff] %v1342
        %1359 = vst [vmem:[%s290 + $0x78] sm:$0xff] %v1343
        %1360 = vst [vmem:[%s297] sm:$0xff] %v1266
        %1361 = vst [vmem:[%s297 + $0x8] sm:$0xff] %v1268
        %1362 = vst [vmem:[%s297 + $0x10] sm:$0xff] %v1272
        %1363 = vst [vmem:[%s297 + $0x18] sm:$0xff] %v1274
        %1364 = vst [vmem:[%s297 + $0x20] sm:$0xff] %v1278
        %1365 = vst [vmem:[%s297 + $0x28] sm:$0xff] %v1280
        %1366 = vst [vmem:[%s297 + $0x30] sm:$0xff] %v1284
        %1367 = vst [vmem:[%s297 + $0x38] sm:$0xff] %v1286
        %1368 = vst [vmem:[%s297 + $0x40] sm:$0xff] %v1290
        %1369 = vst [vmem:[%s297 + $0x48] sm:$0xff] %v1292
        %1370 = vst [vmem:[%s297 + $0x50] sm:$0xff] %v1296
        %1371 = vst [vmem:[%s297 + $0x58] sm:$0xff] %v1298
        %1372 = vst [vmem:[%s297 + $0x60] sm:$0xff] %v1302
        %1373 = vst [vmem:[%s297 + $0x68] sm:$0xff] %v1304
        %1374 = vst [vmem:[%s297 + $0x70] sm:$0xff] %v1308
        %1375 = vst [vmem:[%s297 + $0x78] sm:$0xff] %v1310
        %s1376 = sand.u32 %s169, 1
        %s1377 = scalar_lea.sflag [#allocation3], %s1376
        %s1378 = sand.u32 %s169, 1
        %s1379 = smul.addr %s1378, 128
        %s1380 = scalar_lea.vmem [#allocation2], %s1379
        %s1381 = sand.u32 %s195, 1
        %s1382 = scalar_lea.sflag [#allocation5], %s1381
        %s1383 = sand.u32 %s195, 1
        %s1384 = smul.addr %s1383, 128
        %s1385 = scalar_lea.vmem [#allocation4], %s1384
        // Predicated region
        $region45: #{residual_block_forward.1} parent=43 // pred_check
          %p1386 = pneg %p179
        $region46: #{residual_block_forward.1} parent=43 // pred_check_branch
          %1388 = sbr.rel (%p1386) target = $region48
        $region47: #{residual_block_forward.1} parent=43 // pred_region
          %s1390 = ssub.s32 2048, 2048
          %1391 = vsyncadd %s1377, %s1390
          %s1392 = smul.addr %s25, 16
          %s1393 = smul.addr %s1392, 128
          %s1394 = scalar_lea.hbm %s6, %s1393
          %s1395 = sshll.u32 %s1380, 4
          %s1396 = int_to_ptr.vmem [resolvable:$true] %s1395
          %1401 = dma.vmem_to_hbm [thread:$0]  %s1396, 2048, %s1394, %s1377, 256, 256, 16
        $region48: #{residual_block_forward.1} parent=43 // pred_fallthru
          _
        // Predicated region
        $region49: #{residual_block_forward.1} parent=43 // pred_check
          %p1402 = pneg %p205
        $region50: #{residual_block_forward.1} parent=43 // pred_check_branch
          %1404 = sbr.rel (%p1402) target = $region52
        $region51: #{residual_block_forward.1} parent=43 // pred_region
          %s1406 = ssub.s32 2048, 2048
          %1407 = vsyncadd %s1382, %s1406
          %s1408 = smul.addr %s25, 16
          %s1409 = smul.addr %s1408, 128
          %s1410 = scalar_lea.hbm %s7, %s1409
          %s1411 = sshll.u32 %s1385, 4
          %s1412 = int_to_ptr.vmem [resolvable:$true] %s1411
          %1417 = dma.vmem_to_hbm [thread:$0]  %s1412, 2048, %s1410, %s1382, 256, 256, 16
        $region52: #{residual_block_forward.1} parent=43 // pred_fallthru
          _
      $region44: #{residual_block_forward.1} parent=5 // pred_fallthru
        _
      %p1418 = scmp.le.s32.totalorder 2, %s20
      // Predicated region
      $region53: #{residual_block_forward.1} parent=5 // pred_check
        %p1419 = pneg %p1418
      $region54: #{residual_block_forward.1} parent=5 // pred_check_branch
        %1421 = sbr.rel (%p1419) target = $region56
      $region55: #{residual_block_forward.1} parent=5 // pred_region
        %s1422 = ssub.s32 %s20, 2
        // Predicated region
        $region57: #{residual_block_forward.1} parent=55 // pred_check
          %p1423 = pneg %p185
        $region58: #{residual_block_forward.1} parent=55 // pred_check_branch
          %1425 = sbr.rel (%p1423) target = $region60
        $region59: #{residual_block_forward.1} parent=55 // pred_region
          %s1426 = sand.u32 %s170, 1
          %s1427 = scalar_lea.sflag [#allocation3], %s1426
          %s1428 = sand.u32 %s170, 1
          %s1429 = smul.addr %s1428, 128
          %s1430 = scalar_lea.vmem [#allocation2], %s1429
          %1431 = dma.done %s1427, 2048
        $region60: #{residual_block_forward.1} parent=55 // pred_fallthru
          _
        // Predicated region
        $region61: #{residual_block_forward.1} parent=55 // pred_check
          %p1432 = pneg %p211
        $region62: #{residual_block_forward.1} parent=55 // pred_check_branch
          %1434 = sbr.rel (%p1432) target = $region64
        $region63: #{residual_block_forward.1} parent=55 // pred_region
          %s1435 = sand.u32 %s196, 1
          %s1436 = scalar_lea.sflag [#allocation5], %s1435
          %s1437 = sand.u32 %s196, 1
          %s1438 = smul.addr %s1437, 128
          %s1439 = scalar_lea.vmem [#allocation4], %s1438
          %1440 = dma.done %s1436, 2048
        $region64: #{residual_block_forward.1} parent=55 // pred_fallthru
          _
      $region56: #{residual_block_forward.1} parent=5 // pred_fallthru
        _
    $region6: #{residual_block_forward.1} parent=1 // loop_footer
      %s24 = sadd.s32 1, %s20
    $region7: #{residual_block_forward.1} parent=1 // loop_footer_branch
      %19 = sbr.rel target = $region3
    $region8: #{residual_block_forward.1} parent=1 // loop_exit
      _
    %1441 = vsyncpa [#allocation3], 1
    %s1442 = scalar_lea.sflag [#allocation3], 1
    %1443 = vsyncpa %s1442, 1
    %1444 = vsyncpa [#allocation5], 1
    %s1445 = scalar_lea.sflag [#allocation5], 1
    %1446 = vsyncpa %s1445, 1

</llo_original>
